<compile_context>
chip_gen: v7x
topology: tpu7x:2x2x1
jax: 0.10.0
libtpu: 0.0.40
codegen_flags: <defaults>
</compile_context>

<pallas_src>
import functools

import jax
import jax.numpy as jnp
import numpy as np
from jax.experimental import pallas as pl
from jax.experimental.pallas import tpu as pltpu


# --------------------------------------------------------------------------- #
# Kernels
# --------------------------------------------------------------------------- #
def _scse_fused_kernel(x_ref, w1_ref, b1_ref, w2_ref, b2_ref, wspa_ref, o_ref):
    """Single-pass SCSE on one batch element.  x block layout: (1, C, HW)."""
    x = x_ref[0]                                            # (C, HW), storage dtype

    # channel squeeze: global average pool over HW (f32 accumulation)
    pooled = jnp.mean(x.astype(jnp.float32), axis=-1, keepdims=True)       # (C, 1)

    # channel excitation: Linear -> ReLU -> Linear -> sigmoid (column form, f32)
    h = jax.nn.relu(
        jnp.dot(w1_ref[...], pooled, preferred_element_type=jnp.float32)
        + b1_ref[...])                                                      # (Cr, 1)
    chn = jax.nn.sigmoid(
        jnp.dot(w2_ref[...], h, preferred_element_type=jnp.float32)
        + b2_ref[...])                                                      # (C, 1)

    # spatial excitation: 1x1 conv (no bias) == (1, C) @ (C, HW); native-dtype
    # operands feed the MXU directly (no f32 copy of the tile), f32 accumulate.
    spa = jax.nn.sigmoid(
        jnp.dot(wspa_ref[...], x, preferred_element_type=jnp.float32))     # (1, HW)

    # x*chn + x*spa == x * (chn + spa): gate built in f32, cast once, one multiply
    gate = (chn + spa).astype(x.dtype)                                      # (C, HW)
    o_ref[0] = x * gate


def _scse_stream_kernel(x_ref, chn_ref, wspa_ref, o_ref):
    """Streaming apply on one (batch, HW-tile) block; channel gate precomputed."""
    x = x_ref[0]                                            # (C, THW), storage dtype
    spa = jax.nn.sigmoid(
        jnp.dot(wspa_ref[...], x, preferred_element_type=jnp.float32))     # (1, THW)
    gate = (chn_ref[0] + spa).astype(x.dtype)               # (C, THW)
    o_ref[0] = x * gate


# --------------------------------------------------------------------------- #
# Tiling / budget helpers
# --------------------------------------------------------------------------- #
def _vmem_budget_bytes():
    """Per-generation VMEM budget (bytes), leaving headroom for compiler scratch."""
    try:
        cap = int(pltpu.get_tpu_info().vmem_capacity_bytes)
    except Exception:
        cap = 64 * 1024 * 1024          # conservative fallback: v7x per-TC physical
    return (cap * 3) // 4


def _round_down_128(n):
    return (n // 128) * 128


def _legalize_block_hw(requested, hw):
    """Legal tiles are {hw} or multiples of 128 (< hw).  Rounds a user request."""
    thw = int(requested)
    if thw >= hw:
        return hw
    thw = max(128, _round_down_128(thw))
    return hw if thw >= hw else thw


def _pick_block_hw(hw, c, itemsize, budget_bytes, batch):
    """Largest lane-dense HW tile whose double-buffered in+out block plus the f32
    gate temp stays inside `budget_bytes`."""
    per_col = c * (4 * itemsize + 8)           # 2x dbl-buffered in+out + f32 temps
    max_cols = max(128, budget_bytes // max(1, per_col))
    thw = max(128, _round_down_128(max_cols))
    if batch == 1 and hw > 128:
        # keep >= 2 grid steps so both v7x TensorCores get work
        half = max(128, ((hw // 2 + 127) // 128) * 128)
        thw = min(thw, half)
    return hw if thw >= hw else thw


# --------------------------------------------------------------------------- #
# Wrapper
# --------------------------------------------------------------------------- #
@functools.partial(jax.jit, static_argnames=("block_hw",))
def scse_block(x_nchw, w1, b1, w2, b2, w_spa, *, block_hw=None):
    """x_nchw: (B, C, H, W). Weights follow nn.Linear / nn.Conv2d conventions:
       w1: (Cr, C), b1: (Cr,), w2: (C, Cr), b2: (C,), w_spa: (1, C, 1, 1)."""
    B, C, H, W = x_nchw.shape
    HW = H * W
    out_dtype = x_nchw.dtype
    itemsize = jnp.dtype(out_dtype).itemsize
    budget = _vmem_budget_bytes()
    vmem_limit = int(budget)

    x3 = x_nchw.reshape(B, C, HW)                       # layout-preserving, no copy
    wspa2 = jnp.asarray(w_spa).reshape(1, C).astype(out_dtype)

    # fused single-pass (x read from HBM once) if the per-batch slab fits VMEM
    fused_bytes = C * HW * (4 * itemsize + 12) + 64 * 1024
    use_fused = (block_hw is None) and (fused_bytes <= budget)

    if use_fused:
        # Zero-pad the reduced channel dim to a sublane multiple; exactness is
        # preserved (padded w1/b1 rows give h=relu(0)=0, padded w2 cols add 0).
        Cr = w1.shape[0]
        Cr_pad = max(8, ((Cr + 7) // 8) * 8)
        w1p = jnp.zeros((Cr_pad, C), jnp.float32).at[:Cr].set(
            jnp.asarray(w1, jnp.float32))
        b1p = jnp.zeros((Cr_pad, 1), jnp.float32).at[:Cr, 0].set(
            jnp.asarray(b1, jnp.float32))
        w2p = jnp.zeros((C, Cr_pad), jnp.float32).at[:, :Cr].set(
            jnp.asarray(w2, jnp.float32))
        b2c = jnp.asarray(b2, jnp.float32).reshape(C, 1)

        flops = 5 * B * C * HW + 4 * B * C * Cr_pad
        bytes_accessed = 2 * B * C * HW * itemsize + (2 * C * Cr_pad + 3 * C) * 4

        out = pl.pallas_call(
            _scse_fused_kernel,
            out_shape=jax.ShapeDtypeStruct((B, C, HW), out_dtype),
            grid_spec=pltpu.PrefetchScalarGridSpec(
                num_scalar_prefetch=0,
                grid=(B,),
                in_specs=[
                    pl.BlockSpec((1, C, HW), lambda b: (b, 0, 0)),   # x slab
                    pl.BlockSpec((Cr_pad, C), lambda b: (0, 0)),     # W1
                    pl.BlockSpec((Cr_pad, 1), lambda b: (0, 0)),     # b1
                    pl.BlockSpec((C, Cr_pad), lambda b: (0, 0)),     # W2
                    pl.BlockSpec((C, 1), lambda b: (0, 0)),          # b2
                    pl.BlockSpec((1, C), lambda b: (0, 0)),          # spatial weight
                ],
                out_specs=pl.BlockSpec((1, C, HW), lambda b: (b, 0, 0)),
            ),
            compiler_params=pltpu.CompilerParams(
                dimension_semantics=("parallel",),
                vmem_limit_bytes=vmem_limit),
            cost_estimate=pl.CostEstimate(
                flops=flops, transcendentals=B * (HW + C),
                bytes_accessed=bytes_accessed),
        )(x3, w1p, b1p, w2p, b2c, wspa2)
        return out.reshape(B, C, H, W)

    # ---- streaming fallback: channel gate (tiny M=B MLP) in plain JAX, f32 ----
    pooled = jnp.mean(x_nchw.astype(jnp.float32), axis=(2, 3))             # (B, C)
    h = jax.nn.relu(pooled @ jnp.asarray(w1, jnp.float32).T
                    + jnp.asarray(b1, jnp.float32))                        # (B, Cr)
    chn = jax.nn.sigmoid(h @ jnp.asarray(w2, jnp.float32).T
                         + jnp.asarray(b2, jnp.float32))                   # (B, C)
    chn3 = chn.reshape(B, C, 1)

    if block_hw is not None:
        thw = _legalize_block_hw(block_hw, HW)
    else:
        thw = _pick_block_hw(HW, C, itemsize, budget, B)
    n_hw = pl.cdiv(HW, thw)

    flops = 4 * B * C * HW
    bytes_accessed = 2 * B * C * HW * itemsize + B * C * 4 + C * itemsize

    out = pl.pallas_call(
        _scse_stream_kernel,
        out_shape=jax.ShapeDtypeStruct((B, C, HW), out_dtype),
        grid_spec=pltpu.PrefetchScalarGridSpec(
            num_scalar_prefetch=0,
            grid=(B, n_hw),
            in_specs=[
                pl.BlockSpec((1, C, thw), lambda b, t: (b, 0, t)),   # x tile
                pl.BlockSpec((1, C, 1), lambda b, t: (b, 0, 0)),     # channel gate
                pl.BlockSpec((1, C), lambda b, t: (0, 0)),           # spatial weight
            ],
            out_specs=pl.BlockSpec((1, C, thw), lambda b, t: (b, 0, t)),
        ),
        compiler_params=pltpu.CompilerParams(
            dimension_semantics=("parallel", "parallel"),
            vmem_limit_bytes=vmem_limit),
        cost_estimate=pl.CostEstimate(
            flops=flops, transcendentals=B * HW, bytes_accessed=bytes_accessed),
    )(x3, chn3, wspa2)
    return out.reshape(B, C, H, W)


# --------------------------------------------------------------------------- #
# Pure-JAX reference mirroring the PyTorch forward (NCHW)
# --------------------------------------------------------------------------- #
def _reference(x, w1, b1, w2, b2, w_spa):
    B, C, H, W = x.shape
    pooled = jnp.mean(x, axis=(2, 3))                        # (B, C)
    h = jax.nn.relu(pooled @ w1.T + b1)                      # (B, Cr)
    chn = jax.nn.sigmoid(h @ w2.T + b2).reshape(B, C, 1, 1)  # (B, C, 1, 1)
    spa = jax.nn.sigmoid(
        jnp.einsum("bchw,c->bhw", x, w_spa.reshape(-1))
    )[:, None, :, :]                                         # (B, 1, H, W)
    return x * chn + x * spa


if __name__ == "__main__":
    B, C, H, W = 2, 32, 16, 16
    reduction = 16
    Cr = C // reduction

    key = jax.random.PRNGKey(0)
    k_x, k_w1, k_b1, k_w2, k_b2, k_ws = jax.random.split(key, 6)

    x = jax.random.normal(k_x, (B, C, H, W), dtype=jnp.float32)
    w1 = jax.random.normal(k_w1, (Cr, C), dtype=jnp.float32) * 0.1
    b1 = jax.random.normal(k_b1, (Cr,), dtype=jnp.float32) * 0.1
    w2 = jax.random.normal(k_w2, (C, Cr), dtype=jnp.float32) * 0.1
    b2 = jax.random.normal(k_b2, (C,), dtype=jnp.float32) * 0.1
    w_spa = jax.random.normal(k_ws, (1, C, 1, 1), dtype=jnp.float32) * 0.1

    ref = jax.block_until_ready(_reference(x, w1, b1, w2, b2, w_spa))

    # fused single-pass path (default: per-batch slab fits VMEM)
    out = jax.block_until_ready(scse_block(x, w1, b1, w2, b2, w_spa))
    np.testing.assert_allclose(np.asarray(out), np.asarray(ref), rtol=1e-5, atol=1e-5)

    # streaming path (explicit HW tile -> 2 tiles of 128 per batch element)
    out_tiled = jax.block_until_ready(
        scse_block(x, w1, b1, w2, b2, w_spa, block_hw=128))
    np.testing.assert_allclose(np.asarray(out_tiled), np.asarray(ref),
                               rtol=1e-5, atol=1e-5)

    print("KERNEL_OK")
</pallas_src>

<mosaic_0001>
module attributes {stable_mosaic.version = 11 : i64} {
  func.func @_scse_fused_kernel(%arg0: i32, %arg1: memref<1x32x256xf32, #tpu.memory_space<vmem>>, %arg2: memref<8x32xf32, #tpu.memory_space<vmem>>, %arg3: memref<8x1xf32, #tpu.memory_space<vmem>>, %arg4: memref<32x8xf32, #tpu.memory_space<vmem>>, %arg5: memref<32x1xf32, #tpu.memory_space<vmem>>, %arg6: memref<1x32xf32, #tpu.memory_space<vmem>>, %arg7: memref<1x32x256xf32, #tpu.memory_space<vmem>>) attributes {dimension_semantics = [#tpu.dimension_semantics<parallel>], iteration_bounds = array<i64: 2>, scalar_prefetch = 0 : i64, scratch_operands = 0 : i64, tpu.core_type = #tpu.core_type<tc>, window_params = [{transform_indices = @transform_0, window_bounds = array<i64: 1, 32, 256>}, {pipeline_mode = #tpu.pipeline_mode<synchronous>, transform_indices = @transform_1, window_bounds = array<i64: 8, 32>}, {pipeline_mode = #tpu.pipeline_mode<synchronous>, transform_indices = @transform_2, window_bounds = array<i64: 8, 1>}, {pipeline_mode = #tpu.pipeline_mode<synchronous>, transform_indices = @transform_3, window_bounds = array<i64: 32, 8>}, {pipeline_mode = #tpu.pipeline_mode<synchronous>, transform_indices = @transform_4, window_bounds = array<i64: 32, 1>}, {pipeline_mode = #tpu.pipeline_mode<synchronous>, transform_indices = @transform_5, window_bounds = array<i64: 1, 32>}, {transform_indices = @transform_6, window_bounds = array<i64: 1, 32, 256>}]} {
    %c0 = arith.constant 0 : index
    %c0_0 = arith.constant 0 : index
    %c0_1 = arith.constant 0 : index
    %0 = vector.load %arg1[%c0, %c0_0, %c0_1] : memref<1x32x256xf32, #tpu.memory_space<vmem>>, vector<1x32x256xf32>
    %1 = vector.shape_cast %0 : vector<1x32x256xf32> to vector<32x256xf32>
    %cst = arith.constant dense<0.000000e+00> : vector<32xf32>
    %2 = vector.multi_reduction <add>, %1, %cst [1] : vector<32x256xf32> to vector<32xf32>
    %3 = vector.shape_cast %2 : vector<32xf32> to vector<32x1xf32>
    %cst_2 = arith.constant 2.560000e+02 : f32
    %4 = vector.broadcast %cst_2 : f32 to vector<32x1xf32>
    %5 = arith.divf %3, %4 : vector<32x1xf32>
    %c0_3 = arith.constant 0 : index
    %c0_4 = arith.constant 0 : index
    %6 = vector.load %arg2[%c0_3, %c0_4] : memref<8x32xf32, #tpu.memory_space<vmem>>, vector<8x32xf32>
    %cst_5 = arith.constant dense<0.000000e+00> : vector<8x1xf32>
    %7 = tpu.matmul %6, %5, %cst_5 {dimension_numbers = #tpu.dot_dimension_numbers<[1], [0], [0], [1], [0, 0, 1, 1], [], []>} : vector<8x32xf32>, vector<32x1xf32>, vector<8x1xf32> -> vector<8x1xf32>
    %c0_6 = arith.constant 0 : index
    %c0_7 = arith.constant 0 : index
    %8 = vector.load %arg3[%c0_6, %c0_7] : memref<8x1xf32, #tpu.memory_space<vmem>>, vector<8x1xf32>
    %9 = arith.addf %7, %8 : vector<8x1xf32>
    %cst_8 = arith.constant 0.000000e+00 : f32
    %10 = vector.broadcast %cst_8 : f32 to vector<8x1xf32>
    %11 = arith.maximumf %9, %10 : vector<8x1xf32>
    %c0_9 = arith.constant 0 : index
    %c0_10 = arith.constant 0 : index
    %12 = vector.load %arg4[%c0_9, %c0_10] : memref<32x8xf32, #tpu.memory_space<vmem>>, vector<32x8xf32>
    %cst_11 = arith.constant dense<0.000000e+00> : vector<32x1xf32>
    %13 = tpu.matmul %12, %11, %cst_11 {dimension_numbers = #tpu.dot_dimension_numbers<[1], [0], [0], [1], [0, 0, 1, 1], [], []>} : vector<32x8xf32>, vector<8x1xf32>, vector<32x1xf32> -> vector<32x1xf32>
    %c0_12 = arith.constant 0 : index
    %c0_13 = arith.constant 0 : index
    %14 = vector.load %arg5[%c0_12, %c0_13] : memref<32x1xf32, #tpu.memory_space<vmem>>, vector<32x1xf32>
    %15 = arith.addf %13, %14 : vector<32x1xf32>
    %16 = arith.negf %15 : vector<32x1xf32>
    %17 = math.exp %16 : vector<32x1xf32>
    %cst_14 = arith.constant 1.000000e+00 : f32
    %18 = vector.broadcast %cst_14 : f32 to vector<32x1xf32>
    %19 = arith.addf %18, %17 : vector<32x1xf32>
    %20 = arith.divf %18, %19 : vector<32x1xf32>
    %c0_15 = arith.constant 0 : index
    %c0_16 = arith.constant 0 : index
    %21 = vector.load %arg6[%c0_15, %c0_16] : memref<1x32xf32, #tpu.memory_space<vmem>>, vector<1x32xf32>
    %cst_17 = arith.constant dense<0.000000e+00> : vector<1x256xf32>
    %22 = tpu.matmul %21, %1, %cst_17 {dimension_numbers = #tpu.dot_dimension_numbers<[1], [0], [0], [1], [0, 0, 1, 1], [], []>} : vector<1x32xf32>, vector<32x256xf32>, vector<1x256xf32> -> vector<1x256xf32>
    %23 = arith.negf %22 : vector<1x256xf32>
    %24 = math.exp %23 : vector<1x256xf32>
    %cst_18 = arith.constant 1.000000e+00 : f32
    %25 = vector.broadcast %cst_18 : f32 to vector<1x256xf32>
    %26 = arith.addf %25, %24 : vector<1x256xf32>
    %27 = arith.divf %25, %26 : vector<1x256xf32>
    %28 = vector.broadcast %20 : vector<32x1xf32> to vector<32x256xf32>
    %29 = vector.broadcast %27 : vector<1x256xf32> to vector<32x256xf32>
    %30 = arith.addf %28, %29 : vector<32x256xf32>
    %31 = arith.mulf %1, %30 : vector<32x256xf32>
    %c0_19 = arith.constant 0 : index
    %c0_20 = arith.constant 0 : index
    %c0_21 = arith.constant 0 : index
    %32 = vector.load %arg7[%c0_19, %c0_20, %c0_21] : memref<1x32x256xf32, #tpu.memory_space<vmem>>, vector<1x32x256xf32>
    %33 = vector.shape_cast %32 : vector<1x32x256xf32> to vector<32x256xf32>
    %34 = vector.shape_cast %31 : vector<32x256xf32> to vector<1x32x256xf32>
    tpu.vector_store %arg7[%c0_19, %c0_20, %c0_21], %34 {strides = array<i32>} : memref<1x32x256xf32, #tpu.memory_space<vmem>>, vector<1x32x256xf32>,
    return
  }
  func.func @transform_0(%arg0: i32) -> (i32, i32, i32) {
    %c0_i32 = arith.constant 0 : i32
    %c0_i32_0 = arith.constant 0 : i32
    %c0_i32_1 = arith.constant 0 : i32
    return %arg0, %c0_i32, %c0_i32_0 : i32, i32, i32
  }
  func.func @transform_1(%arg0: i32) -> (i32, i32) {
    %c0_i32 = arith.constant 0 : i32
    %c0_i32_0 = arith.constant 0 : i32
    %c0_i32_1 = arith.constant 0 : i32
    return %c0_i32, %c0_i32_0 : i32, i32
  }
  func.func @transform_2(%arg0: i32) -> (i32, i32) {
    %c0_i32 = arith.constant 0 : i32
    %c0_i32_0 = arith.constant 0 : i32
    %c0_i32_1 = arith.constant 0 : i32
    return %c0_i32, %c0_i32_0 : i32, i32
  }
  func.func @transform_3(%arg0: i32) -> (i32, i32) {
    %c0_i32 = arith.constant 0 : i32
    %c0_i32_0 = arith.constant 0 : i32
    %c0_i32_1 = arith.constant 0 : i32
    return %c0_i32, %c0_i32_0 : i32, i32
  }
  func.func @transform_4(%arg0: i32) -> (i32, i32) {
    %c0_i32 = arith.constant 0 : i32
    %c0_i32_0 = arith.constant 0 : i32
    %c0_i32_1 = arith.constant 0 : i32
    return %c0_i32, %c0_i32_0 : i32, i32
  }
  func.func @transform_5(%arg0: i32) -> (i32, i32) {
    %c0_i32 = arith.constant 0 : i32
    %c0_i32_0 = arith.constant 0 : i32
    %c0_i32_1 = arith.constant 0 : i32
    return %c0_i32, %c0_i32_0 : i32, i32
  }
  func.func @transform_6(%arg0: i32) -> (i32, i32, i32) {
    %c0_i32 = arith.constant 0 : i32
    %c0_i32_0 = arith.constant 0 : i32
    %c0_i32_1 = arith.constant 0 : i32
    return %arg0, %c0_i32, %c0_i32_0 : i32, i32, i32
  }
}

</mosaic_0001>

<llo_original>
// kernel: scse_block.1
$region0: #{scse_block.1}
  #allocation0 [shape = 'u32[]', space=smem, size = 0x4, offset = 0x4, fixed_abs, tag = 'smem constant byte address 0x4 - core index']
  #allocation1 [shape = 'u32[144,128]{1,0:T(1,128)}', space=vmem, size = 0x12000, scoped, tag = 'internal scratch']
  %s0 = inlined_call_operand.vmem [shape: f32[2,32,256], index: 0, kind: input, shape index: {}]
  %s1 = inlined_call_operand.vmem [shape: f32[8,32], index: 1, kind: input, shape index: {}]
  %s2 = inlined_call_operand.vmem [shape: f32[8,1], index: 2, kind: input, shape index: {}]
  %s3 = inlined_call_operand.vmem [shape: f32[32,8], index: 3, kind: input, shape index: {}]
  %s4 = inlined_call_operand.vmem [shape: f32[32,1], index: 4, kind: input, shape index: {}]
  %s5 = inlined_call_operand.vmem [shape: f32[1,32], index: 5, kind: input, shape index: {}]
  %s6 = inlined_call_operand.vmem [shape: f32[2,32,256], index: 6, kind: output, shape index: {}]
  %s7 = sld [smem:[#allocation0]]
  $region57: #{scse_block.1} parent=0
    _
  %s9 = ssub.s32 1, %s7
  %s10 = scalar_select 0, %s9, %s7
  loop: start=0, step=1, limit=4
  $region2: #{scse_block.1} parent=0 // loop_pre_header
    _
  $region3: #{scse_block.1} parent=0 // loop_header
    %s12 = sphi 0, %s16
    %p13 = scmp.ge.s32.totalorder %s12, 4
    %s22 = sphi 0, %s24
    %s25 = sphi 0, %s22
    %s26 = sphi 0, %s25
    %s42 = sphi 0, %s26
    %s46 = sphi 0, %s46
    %s48 = sphi 0, %s46
    %s49 = sphi 0, %s48
    %s63 = sphi 0, %s49
    %s67 = sphi 0, %s67
    %s69 = sphi 0, %s67
    %s70 = sphi 0, %s69
    %s84 = sphi 0, %s70
    %s88 = sphi 0, %s88
    %s90 = sphi 0, %s88
    %s91 = sphi 0, %s90
    %s105 = sphi 0, %s91
    %s109 = sphi 0, %s109
    %s111 = sphi 0, %s109
    %s112 = sphi 0, %s111
    %s126 = sphi 0, %s112
    %s130 = sphi 0, %s130
    %s132 = sphi 0, %s130
    %s133 = sphi 0, %s132
    %s147 = sphi 0, %s133
    %s153 = sphi 0, %s155
    %s156 = sphi 0, %s153
    %s157 = sphi 0, %s156
    %s173 = sphi 0, %s157
  $region4: #{scse_block.1} parent=0 // loop_header_branch
    %15 = sbr.rel (%p13) target = $region8
  $region5: #{scse_block.1} parent=0 // loop_body
    %s17 = ssub.s32 %s12, 1
    %s18 = ssub.s32 %s12, 2
    %s19 = sadd.s32 %s12, 1
    %s20 = ssub.s32 %s12, %s19
    %p21 = scmp.eq.s32.totalorder %s20, 0
    %s23 = sadd.s32 %s22, 1
    %s24 = scalar_select %p21, %s22, %s23
    %p27 = pneg %p21
    %p28 = scmp.eq.s32.totalorder %s12, 1
    %p29 = por %p27, %p28
    %p30 = scmp.ne.s32.totalorder %s22, %s25
    %p31 = scmp.eq.s32.totalorder %s12, 0
    %p32 = por %p30, %p31
    %p33 = scmp.ne.s32.totalorder %s22, %s25
    %p34 = scmp.eq.s32.totalorder %s17, 1
    %p35 = por %p33, %p34
    %p36 = scmp.ne.s32.totalorder %s25, %s26
    %p37 = scmp.eq.s32.totalorder %s17, 0
    %p38 = por %p36, %p37
    %p39 = scmp.ne.s32.totalorder %s25, %s26
    %p40 = scmp.eq.s32.totalorder %s18, 1
    %p41 = por %p39, %p40
    %p43 = scmp.ne.s32.totalorder %s26, %s42
    %p44 = scmp.eq.s32.totalorder %s18, 0
    %p45 = por %p43, %p44
    %s47 = sadd.s32 %s46, 1
    %p50 = scmp.eq.s32.totalorder %s12, 1
    %p51 = scmp.ne.s32.totalorder %s46, %s48
    %p52 = scmp.eq.s32.totalorder %s12, 0
    %p53 = por %p51, %p52
    %p54 = scmp.ne.s32.totalorder %s46, %s48
    %p55 = scmp.eq.s32.totalorder %s17, 1
    %p56 = por %p54, %p55
    %p57 = scmp.ne.s32.totalorder %s48, %s49
    %p58 = scmp.eq.s32.totalorder %s17, 0
    %p59 = por %p57, %p58
    %p60 = scmp.ne.s32.totalorder %s48, %s49
    %p61 = scmp.eq.s32.totalorder %s18, 1
    %p62 = por %p60, %p61
    %p64 = scmp.ne.s32.totalorder %s49, %s63
    %p65 = scmp.eq.s32.totalorder %s18, 0
    %p66 = por %p64, %p65
    %s68 = sadd.s32 %s67, 1
    %p71 = scmp.eq.s32.totalorder %s12, 1
    %p72 = scmp.ne.s32.totalorder %s67, %s69
    %p73 = scmp.eq.s32.totalorder %s12, 0
    %p74 = por %p72, %p73
    %p75 = scmp.ne.s32.totalorder %s67, %s69
    %p76 = scmp.eq.s32.totalorder %s17, 1
    %p77 = por %p75, %p76
    %p78 = scmp.ne.s32.totalorder %s69, %s70
    %p79 = scmp.eq.s32.totalorder %s17, 0
    %p80 = por %p78, %p79
    %p81 = scmp.ne.s32.totalorder %s69, %s70
    %p82 = scmp.eq.s32.totalorder %s18, 1
    %p83 = por %p81, %p82
    %p85 = scmp.ne.s32.totalorder %s70, %s84
    %p86 = scmp.eq.s32.totalorder %s18, 0
    %p87 = por %p85, %p86
    %s89 = sadd.s32 %s88, 1
    %p92 = scmp.eq.s32.totalorder %s12, 1
    %p93 = scmp.ne.s32.totalorder %s88, %s90
    %p94 = scmp.eq.s32.totalorder %s12, 0
    %p95 = por %p93, %p94
    %p96 = scmp.ne.s32.totalorder %s88, %s90
    %p97 = scmp.eq.s32.totalorder %s17, 1
    %p98 = por %p96, %p97
    %p99 = scmp.ne.s32.totalorder %s90, %s91
    %p100 = scmp.eq.s32.totalorder %s17, 0
    %p101 = por %p99, %p100
    %p102 = scmp.ne.s32.totalorder %s90, %s91
    %p103 = scmp.eq.s32.totalorder %s18, 1
    %p104 = por %p102, %p103
    %p106 = scmp.ne.s32.totalorder %s91, %s105
    %p107 = scmp.eq.s32.totalorder %s18, 0
    %p108 = por %p106, %p107
    %s110 = sadd.s32 %s109, 1
    %p113 = scmp.eq.s32.totalorder %s12, 1
    %p114 = scmp.ne.s32.totalorder %s109, %s111
    %p115 = scmp.eq.s32.totalorder %s12, 0
    %p116 = por %p114, %p115
    %p117 = scmp.ne.s32.totalorder %s109, %s111
    %p118 = scmp.eq.s32.totalorder %s17, 1
    %p119 = por %p117, %p118
    %p120 = scmp.ne.s32.totalorder %s111, %s112
    %p121 = scmp.eq.s32.totalorder %s17, 0
    %p122 = por %p120, %p121
    %p123 = scmp.ne.s32.totalorder %s111, %s112
    %p124 = scmp.eq.s32.totalorder %s18, 1
    %p125 = por %p123, %p124
    %p127 = scmp.ne.s32.totalorder %s112, %s126
    %p128 = scmp.eq.s32.totalorder %s18, 0
    %p129 = por %p127, %p128
    %s131 = sadd.s32 %s130, 1
    %p134 = scmp.eq.s32.totalorder %s12, 1
    %p135 = scmp.ne.s32.totalorder %s130, %s132
    %p136 = scmp.eq.s32.totalorder %s12, 0
    %p137 = por %p135, %p136
    %p138 = scmp.ne.s32.totalorder %s130, %s132
    %p139 = scmp.eq.s32.totalorder %s17, 1
    %p140 = por %p138, %p139
    %p141 = scmp.ne.s32.totalorder %s132, %s133
    %p142 = scmp.eq.s32.totalorder %s17, 0
    %p143 = por %p141, %p142
    %p144 = scmp.ne.s32.totalorder %s132, %s133
    %p145 = scmp.eq.s32.totalorder %s18, 1
    %p146 = por %p144, %p145
    %p148 = scmp.ne.s32.totalorder %s133, %s147
    %p149 = scmp.eq.s32.totalorder %s18, 0
    %p150 = por %p148, %p149
    %s151 = ssub.s32 %s12, %s19
    %p152 = scmp.eq.s32.totalorder %s151, 0
    %s154 = sadd.s32 %s153, 1
    %s155 = scalar_select %p152, %s153, %s154
    %p158 = pneg %p152
    %p159 = scmp.eq.s32.totalorder %s12, 1
    %p160 = por %p158, %p159
    %p161 = scmp.ne.s32.totalorder %s153, %s156
    %p162 = scmp.eq.s32.totalorder %s12, 0
    %p163 = por %p161, %p162
    %p164 = scmp.ne.s32.totalorder %s153, %s156
    %p165 = scmp.eq.s32.totalorder %s17, 1
    %p166 = por %p164, %p165
    %p167 = scmp.ne.s32.totalorder %s156, %s157
    %p168 = scmp.eq.s32.totalorder %s17, 0
    %p169 = por %p167, %p168
    %p170 = scmp.ne.s32.totalorder %s156, %s157
    %p171 = scmp.eq.s32.totalorder %s18, 1
    %p172 = por %p170, %p171
    %p174 = scmp.ne.s32.totalorder %s157, %s173
    %p175 = scmp.eq.s32.totalorder %s18, 0
    %p176 = por %p174, %p175
    %p177 = scmp.le.s32.totalorder 1, %s12
    %p178 = scmp.lt.s32.totalorder %s12, 3
    %p179 = pnand %p177, %p178
    %p180 = pneg %p179
    // Predicated region
    $region9: #{scse_block.1} parent=5 // pred_check
      _
    $region10: #{scse_block.1} parent=5 // pred_check_branch
      %182 = sbr.rel (%p179) target = $region12
    $region11: #{scse_block.1} parent=5 // pred_region
      %s183 = ssub.s32 %s12, 1
      // Predicated region
      $region13: #{scse_block.1} parent=11 // pred_check
        %p184 = pneg %p59
      $region14: #{scse_block.1} parent=11 // pred_check_branch
        %186 = sbr.rel (%p184) target = $region16
      $region15: #{scse_block.1} parent=11 // pred_region
        _
      $region16: #{scse_block.1} parent=11 // pred_fallthru
        _
      // Predicated region
      $region17: #{scse_block.1} parent=11 // pred_check
        %p187 = pneg %p80
      $region18: #{scse_block.1} parent=11 // pred_check_branch
        %189 = sbr.rel (%p187) target = $region20
      $region19: #{scse_block.1} parent=11 // pred_region
        _
      $region20: #{scse_block.1} parent=11 // pred_fallthru
        _
      // Predicated region
      $region21: #{scse_block.1} parent=11 // pred_check
        %p190 = pneg %p101
      $region22: #{scse_block.1} parent=11 // pred_check_branch
        %192 = sbr.rel (%p190) target = $region24
      $region23: #{scse_block.1} parent=11 // pred_region
        _
      $region24: #{scse_block.1} parent=11 // pred_fallthru
        _
      // Predicated region
      $region25: #{scse_block.1} parent=11 // pred_check
        %p193 = pneg %p122
      $region26: #{scse_block.1} parent=11 // pred_check_branch
        %195 = sbr.rel (%p193) target = $region28
      $region27: #{scse_block.1} parent=11 // pred_region
        _
      $region28: #{scse_block.1} parent=11 // pred_fallthru
        _
      // Predicated region
      $region29: #{scse_block.1} parent=11 // pred_check
        %p196 = pneg %p143
      $region30: #{scse_block.1} parent=11 // pred_check_branch
        %198 = sbr.rel (%p196) target = $region32
      $region31: #{scse_block.1} parent=11 // pred_region
        _
      $region32: #{scse_block.1} parent=11 // pred_fallthru
        _
    $region12: #{scse_block.1} parent=5 // pred_fallthru
      _
    %p199 = scmp.lt.s32.totalorder %s12, 2
    // Predicated region
    $region33: #{scse_block.1} parent=5 // pred_check
      %p200 = pneg %p199
    $region34: #{scse_block.1} parent=5 // pred_check_branch
      %202 = sbr.rel (%p200) target = $region36
    $region35: #{scse_block.1} parent=5 // pred_region
      // Predicated region
      $region37: #{scse_block.1} parent=35 // pred_check
        %p203 = pneg %p32
      $region38: #{scse_block.1} parent=35 // pred_check_branch
        %205 = sbr.rel (%p203) target = $region40
      $region39: #{scse_block.1} parent=35 // pred_region
        %p206 = scmp.lt.s32.totalorder %s12, 1
        %s207 = scalar_select %p206, %s12, 1
        %s208 = smul.addr %s207, 8
        %s209 = smul.addr %s208, 8
        %s210 = scalar_lea.vmem %s0, %s209
      $region40: #{scse_block.1} parent=35 // pred_fallthru
        _
    $region36: #{scse_block.1} parent=5 // pred_fallthru
      _
    %p211 = scmp.le.s32.totalorder 1, %s12
    %p212 = scmp.lt.s32.totalorder %s12, 3
    %p213 = pnand %p211, %p212
    %p214 = pneg %p213
    // Predicated region
    $region41: #{scse_block.1} parent=5 // pred_check
      _
    $region42: #{scse_block.1} parent=5 // pred_check_branch
      %216 = sbr.rel (%p213) target = $region44
    $region43: #{scse_block.1} parent=5 // pred_region
      %s217 = ssub.s32 %s12, 1
      %p218 = scmp.lt.s32.totalorder %s17, 1
      %s219 = scalar_select %p218, %s17, 1
      %s220 = smul.addr %s219, 8
      %s221 = smul.addr %s220, 8
      %s222 = scalar_lea.vmem %s0, %s221
      %p223 = pneg %p38
      %p224 = pneg %p35
      %p225 = pneg %p59
      %p226 = pneg %p56
      %p227 = pneg %p80
      %p228 = pneg %p77
      %p229 = pneg %p101
      %p230 = pneg %p98
      %p231 = pneg %p122
      %p232 = pneg %p119
      %p233 = pneg %p143
      %p234 = pneg %p140
      %p235 = pneg %p169
      %p236 = pneg %p166
      %p237 = scmp.lt.s32.totalorder %s17, 1
      %s238 = scalar_select %p237, %s17, 1
      %s239 = smul.addr %s238, 8
      %s240 = smul.addr %s239, 8
      %s241 = scalar_lea.vmem %s6, %s240
      %p242 = scmp.lt.s32.totalorder %s17, 1
      %s243 = scalar_select %p242, %s17, 1
      %s244 = smul.addr %s243, 8
      %s245 = smul.addr %s244, 8
      %s246 = scalar_lea.vmem %s0, %s245
      %p247 = scmp.lt.s32.totalorder %s17, 1
      %s248 = scalar_select %p247, %s17, 1
      %s249 = smul.addr %s248, 8
      %s250 = smul.addr %s249, 8
      %s251 = scalar_lea.vmem %s6, %s250
      %v252 = vld [vmem:[%s246] sm:$0xff]
      %v253 = vld [vmem:[%s246 + $0x8] sm:$0xff]
      %v254 = vld [vmem:[%s246 + $0x10] sm:$0xff]
      %v255 = vld [vmem:[%s246 + $0x18] sm:$0xff]
      %v256 = vld [vmem:[%s246 + $0x20] sm:$0xff]
      %v257 = vld [vmem:[%s246 + $0x28] sm:$0xff]
      %v258 = vld [vmem:[%s246 + $0x30] sm:$0xff]
      %v259 = vld [vmem:[%s246 + $0x38] sm:$0xff]
      %v260 = vadd.f32 %v252, %v253
      %261 = vadd.xlane.f32.xlu0 %v260
      %v262 = vpop.xlane.xlu0 %261
      %v263 = vadd.f32 %v254, %v255
      %264 = vadd.xlane.f32.xlu0 %v263
      %v265 = vpop.xlane.xlu0 %264
      %v266 = vadd.f32 %v256, %v257
      %267 = vadd.xlane.f32.xlu0 %v266
      %v268 = vpop.xlane.xlu0 %267
      %v269 = vadd.f32 %v258, %v259
      %270 = vadd.xlane.f32.xlu0 %v269
      %v271 = vpop.xlane.xlu0 %270
      %v272 = vrcp.pop 256.0
      %v273 = vmul.f32 %v262, %v272
      %v274 = vmul.f32 %v265, %v272
      %v275 = vmul.f32 %v268, %v272
      %v276 = vmul.f32 %v271, %v272
      %v277 = vld [vmem:[%s1] sm:$0xff]
      %v278 = vld [vmem:[%s2] sm:$0xff]
      %vm279 = vcmask 261120
      %v281 = vsel %vm279, %v277, 0
      %283 = vmatprep.subr.mxu0 0.0
      %284 = vmatpush1.msra.mxu0 %v273
      %285 = vmatprep.subr.mxu0 0.0
      %286 = vmatpush1.msra.mxu0 %v274
      %287 = vmatprep.subr.mxu0 0.0
      %288 = vmatpush1.msra.mxu0 %v275
      %289 = vmatprep.subr.mxu0 0.0
      %290 = vmatpush1.msra.mxu0 %v276
      %291 = vmatprep.subr.mxu0 0.0
      %292 = vmatpush1.msra.mxu0 0.0
      %293 = vmatprep.subr.mxu0 0.0
      %294 = vmatpush1.msra.mxu0 0.0
      %295 = vmatprep.subr.mxu0 0.0
      %296 = vmatpush1.msra.mxu0 0.0
      %297 = vmatprep.subr.mxu0 0.0
      %298 = vmatpush1.msra.mxu0 0.0
      %299 = vmatprep.subr.mxu0 0.0
      %300 = vmatpush1.msra.mxu0 0.0
      %301 = vmatprep.subr.mxu0 0.0
      %302 = vmatpush1.msra.mxu0 0.0
      %303 = vmatprep.subr.mxu0 0.0
      %304 = vmatpush1.msra.mxu0 0.0
      %305 = vmatprep.subr.mxu0 0.0
      %306 = vmatpush1.msra.mxu0 0.0
      %307 = vmatprep.subr.mxu0 0.0
      %308 = vmatpush1.msra.mxu0 0.0
      %309 = vmatprep.subr.mxu0 0.0
      %310 = vmatpush1.msra.mxu0 0.0
      %311 = vmatprep.subr.mxu0 0.0
      %312 = vmatpush1.msra.mxu0 0.0
      %313 = vmatprep.subr.mxu0 0.0
      %314 = vmatpush1.msra.mxu0 0.0
      %315 = vmatprep.subr.mxu0 0.0
      %316 = vmatpush1.msra.mxu0 0.0
      %317 = vmatprep.subr.mxu0 0.0
      %318 = vmatpush1.msra.mxu0 0.0
      %319 = vmatprep.subr.mxu0 0.0
      %320 = vmatpush1.msra.mxu0 0.0
      %321 = vmatprep.subr.mxu0 0.0
      %322 = vmatpush1.msra.mxu0 0.0
      %323 = vmatprep.subr.mxu0 0.0
      %324 = vmatpush1.msra.mxu0 0.0
      %325 = vmatprep.subr.mxu0 0.0
      %326 = vmatpush1.msra.mxu0 0.0
      %327 = vmatprep.subr.mxu0 0.0
      %328 = vmatpush1.msra.mxu0 0.0
      %329 = vmatprep.subr.mxu0 0.0
      %330 = vmatpush1.msra.mxu0 0.0
      %331 = vmatprep.subr.mxu0 0.0
      %332 = vmatpush1.msra.mxu0 0.0
      %333 = vmatprep.subr.mxu0 0.0
      %334 = vmatpush1.msra.mxu0 0.0
      %335 = vmatprep.subr.mxu0 0.0
      %336 = vmatpush1.msra.mxu0 0.0
      %337 = vmatprep.subr.mxu0 0.0
      %338 = vmatpush1.msra.mxu0 0.0
      %339 = vmatprep.subr.mxu0 0.0
      %340 = vmatpush1.msra.mxu0 0.0
      %341 = vmatprep.subr.mxu0 0.0
      %342 = vmatpush1.msra.mxu0 0.0
      %343 = vmatprep.subr.mxu0 0.0
      %344 = vmatpush1.msra.mxu0 0.0
      %345 = vmatprep.subr.mxu0 0.0
      %346 = vmatpush1.msra.mxu0 0.0
      %347 = vmatprep.mubr.f32.mxu0 0.0
      %348 = vmatmul.mubr.f32.gmra.mrb[0].mxu0 %v281
      %v349 = vpop.f32.mrb[0].mxu0
      %v350 = vadd.f32 %v278, %v349
      %v351 = vpop.f32.mrb[0].mxu0
      %352 = vdwg.mxu0
      %v353 = vmax.f32 %v350, 0.0
      %v354 = vld [vmem:[%s3] sm:$0xff]
      %v355 = vld [vmem:[%s3 + $0x8] sm:$0xff]
      %v356 = vld [vmem:[%s3 + $0x10] sm:$0xff]
      %v357 = vld [vmem:[%s3 + $0x18] sm:$0xff]
      %v358 = vld [vmem:[%s4] sm:$0xff]
      %v359 = vld [vmem:[%s4 + $0x8] sm:$0xff]
      %v360 = vld [vmem:[%s4 + $0x10] sm:$0xff]
      %v361 = vld [vmem:[%s4 + $0x18] sm:$0xff]
      %vm362 = vcmask 64512
      %v364 = vsel %vm362, %v354, 0
      %v367 = vsel %vm362, %v355, 0
      %v370 = vsel %vm362, %v356, 0
      %v373 = vsel %vm362, %v357, 0
      %375 = vmatprep.subr.mxu0 0.0
      %376 = vmatpush1.msra.mxu0 %v353
      %377 = vmatprep.subr.mxu0 0.0
      %378 = vmatpush1.msra.mxu0 0.0
      %379 = vmatprep.subr.mxu0 0.0
      %380 = vmatpush1.msra.mxu0 0.0
      %381 = vmatprep.subr.mxu0 0.0
      %382 = vmatpush1.msra.mxu0 0.0
      %383 = vmatprep.subr.mxu0 0.0
      %384 = vmatpush1.msra.mxu0 0.0
      %385 = vmatprep.subr.mxu0 0.0
      %386 = vmatpush1.msra.mxu0 0.0
      %387 = vmatprep.subr.mxu0 0.0
      %388 = vmatpush1.msra.mxu0 0.0
      %389 = vmatprep.subr.mxu0 0.0
      %390 = vmatpush1.msra.mxu0 0.0
      %391 = vmatprep.subr.mxu0 0.0
      %392 = vmatpush1.msra.mxu0 0.0
      %393 = vmatprep.subr.mxu0 0.0
      %394 = vmatpush1.msra.mxu0 0.0
      %395 = vmatprep.subr.mxu0 0.0
      %396 = vmatpush1.msra.mxu0 0.0
      %397 = vmatprep.subr.mxu0 0.0
      %398 = vmatpush1.msra.mxu0 0.0
      %399 = vmatprep.subr.mxu0 0.0
      %400 = vmatpush1.msra.mxu0 0.0
      %401 = vmatprep.subr.mxu0 0.0
      %402 = vmatpush1.msra.mxu0 0.0
      %403 = vmatprep.subr.mxu0 0.0
      %404 = vmatpush1.msra.mxu0 0.0
      %405 = vmatprep.subr.mxu0 0.0
      %406 = vmatpush1.msra.mxu0 0.0
      %407 = vmatprep.subr.mxu0 0.0
      %408 = vmatpush1.msra.mxu0 0.0
      %409 = vmatprep.subr.mxu0 0.0
      %410 = vmatpush1.msra.mxu0 0.0
      %411 = vmatprep.subr.mxu0 0.0
      %412 = vmatpush1.msra.mxu0 0.0
      %413 = vmatprep.subr.mxu0 0.0
      %414 = vmatpush1.msra.mxu0 0.0
      %415 = vmatprep.subr.mxu0 0.0
      %416 = vmatpush1.msra.mxu0 0.0
      %417 = vmatprep.subr.mxu0 0.0
      %418 = vmatpush1.msra.mxu0 0.0
      %419 = vmatprep.subr.mxu0 0.0
      %420 = vmatpush1.msra.mxu0 0.0
      %421 = vmatprep.subr.mxu0 0.0
      %422 = vmatpush1.msra.mxu0 0.0
      %423 = vmatprep.subr.mxu0 0.0
      %424 = vmatpush1.msra.mxu0 0.0
      %425 = vmatprep.subr.mxu0 0.0
      %426 = vmatpush1.msra.mxu0 0.0
      %427 = vmatprep.subr.mxu0 0.0
      %428 = vmatpush1.msra.mxu0 0.0
      %429 = vmatprep.subr.mxu0 0.0
      %430 = vmatpush1.msra.mxu0 0.0
      %431 = vmatprep.subr.mxu0 0.0
      %432 = vmatpush1.msra.mxu0 0.0
      %433 = vmatprep.subr.mxu0 0.0
      %434 = vmatpush1.msra.mxu0 0.0
      %435 = vmatprep.subr.mxu0 0.0
      %436 = vmatpush1.msra.mxu0 0.0
      %437 = vmatprep.subr.mxu0 0.0
      %438 = vmatpush1.msra.mxu0 0.0
      %439 = vmatprep.mubr.f32.mxu0 0.0
      %440 = vmatmul.mubr.f32.gmra.mrb[0].mxu0 %v364
      %v441 = vpop.f32.mrb[0].mxu0
      %v442 = vadd.f32 %v358, %v441
      %v443 = vpop.f32.mrb[0].mxu0
      %444 = vmatprep.mubr.f32.mxu0 0.0
      %445 = vmatmul.mubr.f32.gmra.mrb[0].mxu0 %v367
      %v446 = vpop.f32.mrb[0].mxu0
      %v447 = vadd.f32 %v359, %v446
      %v448 = vpop.f32.mrb[0].mxu0
      %449 = vmatprep.mubr.f32.mxu0 0.0
      %450 = vmatmul.mubr.f32.gmra.mrb[0].mxu0 %v370
      %v451 = vpop.f32.mrb[0].mxu0
      %v452 = vadd.f32 %v360, %v451
      %v453 = vpop.f32.mrb[0].mxu0
      %454 = vmatprep.mubr.f32.mxu0 0.0
      %455 = vmatmul.mubr.f32.gmra.mrb[0].mxu0 %v373
      %v456 = vpop.f32.mrb[0].mxu0
      %v457 = vadd.f32 %v361, %v456
      %v458 = vpop.f32.mrb[0].mxu0
      %459 = vdwg.mxu0
      %v460 = vxor.u32 %v442, 2147483648
      %v461 = vxor.u32 %v447, 2147483648
      %v462 = vxor.u32 %v452, 2147483648
      %v463 = vxor.u32 %v457, 2147483648
      %v464 = vmul.f32 %v460, 1.442695
      %v465 = vpow.pop %v464
      %v466 = vmul.f32 %v461, 1.442695
      %v467 = vpow.pop %v466
      %v468 = vmul.f32 %v462, 1.442695
      %v469 = vpow.pop %v468
      %v470 = vmul.f32 %v463, 1.442695
      %v471 = vpow.pop %v470
      %v472 = vadd.f32 %v465, 1.0
      %v473 = vadd.f32 %v467, 1.0
      %v474 = vadd.f32 %v469, 1.0
      %v475 = vadd.f32 %v471, 1.0
      %v476 = vrcp.pop %v472
      %v477 = vmul.f32 1.0, %v476
      %v478 = vrcp.pop %v473
      %v479 = vmul.f32 1.0, %v478
      %v480 = vrcp.pop %v474
      %v481 = vmul.f32 1.0, %v480
      %v482 = vrcp.pop %v475
      %v483 = vmul.f32 1.0, %v482
      %v484 = vld [vmem:[%s5] sm:$0x1]
      %v486 = vsel %vm279, %v484, 0
      %488 = vmatprep.subr.mxu0 %v253
      %489 = vmatpush1.msra.mxu0 %v252
      %490 = vmatprep.subr.mxu0 %v255
      %491 = vmatpush1.msra.mxu0 %v254
      %492 = vmatprep.subr.mxu0 %v257
      %493 = vmatpush1.msra.mxu0 %v256
      %494 = vmatprep.subr.mxu0 %v259
      %495 = vmatpush1.msra.mxu0 %v258
      %496 = vmatprep.subr.mxu0 0.0
      %497 = vmatpush1.msra.mxu0 0.0
      %498 = vmatprep.subr.mxu0 0.0
      %499 = vmatpush1.msra.mxu0 0.0
      %500 = vmatprep.subr.mxu0 0.0
      %501 = vmatpush1.msra.mxu0 0.0
      %502 = vmatprep.subr.mxu0 0.0
      %503 = vmatpush1.msra.mxu0 0.0
      %504 = vmatprep.subr.mxu0 0.0
      %505 = vmatpush1.msra.mxu0 0.0
      %506 = vmatprep.subr.mxu0 0.0
      %507 = vmatpush1.msra.mxu0 0.0
      %508 = vmatprep.subr.mxu0 0.0
      %509 = vmatpush1.msra.mxu0 0.0
      %510 = vmatprep.subr.mxu0 0.0
      %511 = vmatpush1.msra.mxu0 0.0
      %512 = vmatprep.subr.mxu0 0.0
      %513 = vmatpush1.msra.mxu0 0.0
      %514 = vmatprep.subr.mxu0 0.0
      %515 = vmatpush1.msra.mxu0 0.0
      %516 = vmatprep.subr.mxu0 0.0
      %517 = vmatpush1.msra.mxu0 0.0
      %518 = vmatprep.subr.mxu0 0.0
      %519 = vmatpush1.msra.mxu0 0.0
      %520 = vmatprep.subr.mxu0 0.0
      %521 = vmatpush1.msra.mxu0 0.0
      %522 = vmatprep.subr.mxu0 0.0
      %523 = vmatpush1.msra.mxu0 0.0
      %524 = vmatprep.subr.mxu0 0.0
      %525 = vmatpush1.msra.mxu0 0.0
      %526 = vmatprep.subr.mxu0 0.0
      %527 = vmatpush1.msra.mxu0 0.0
      %528 = vmatprep.subr.mxu0 0.0
      %529 = vmatpush1.msra.mxu0 0.0
      %530 = vmatprep.subr.mxu0 0.0
      %531 = vmatpush1.msra.mxu0 0.0
      %532 = vmatprep.subr.mxu0 0.0
      %533 = vmatpush1.msra.mxu0 0.0
      %534 = vmatprep.subr.mxu0 0.0
      %535 = vmatpush1.msra.mxu0 0.0
      %536 = vmatprep.subr.mxu0 0.0
      %537 = vmatpush1.msra.mxu0 0.0
      %538 = vmatprep.subr.mxu0 0.0
      %539 = vmatpush1.msra.mxu0 0.0
      %540 = vmatprep.subr.mxu0 0.0
      %541 = vmatpush1.msra.mxu0 0.0
      %542 = vmatprep.subr.mxu0 0.0
      %543 = vmatpush1.msra.mxu0 0.0
      %544 = vmatprep.subr.mxu0 0.0
      %545 = vmatpush1.msra.mxu0 0.0
      %546 = vmatprep.subr.mxu0 0.0
      %547 = vmatpush1.msra.mxu0 0.0
      %548 = vmatprep.subr.mxu0 0.0
      %549 = vmatpush1.msra.mxu0 0.0
      %550 = vmatprep.subr.mxu0 0.0
      %551 = vmatpush1.msra.mxu0 0.0
      %552 = vmatprep.mubr.f32.mxu0 0.0
      %553 = vmatmul.mubr.f32.gmra.mrb[0].mxu0 %v486
      %v554 = vpop.f32.mrb[0].mxu0
      %v555 = vadd.f32 0.0, %v554
      %v556 = vpop.f32.mrb[0].mxu0
      %v557 = vadd.f32 0.0, %v556
      %558 = vdwg.mxu0
      %v559 = vxor.u32 %v555, 2147483648
      %v560 = vxor.u32 %v557, 2147483648
      %v561 = vmul.f32 %v559, 1.442695
      %v562 = vpow.pop %v561
      %v563 = vmul.f32 %v560, 1.442695
      %v564 = vpow.pop %v563
      %v565 = vadd.f32 %v562, 1.0
      %v566 = vadd.f32 %v564, 1.0
      %v567 = vrcp.pop %v565
      %v568 = vmul.f32 1.0, %v567
      %v569 = vrcp.pop %v566
      %v570 = vmul.f32 1.0, %v569
      %572 = vset.pattern.permute.xlu0 0
      %573 = vperm.xlu0 %572, %v477
      %v574 = vpop.permute.xlu0 %573
      %577 = vset.pattern.permute.xlu0 0
      %578 = vperm.xlu0 %577, %v479
      %v579 = vpop.permute.xlu0 %578
      %582 = vset.pattern.permute.xlu0 0
      %583 = vperm.xlu0 %582, %v481
      %v584 = vpop.permute.xlu0 %583
      %587 = vset.pattern.permute.xlu0 0
      %588 = vperm.xlu0 %587, %v483
      %v589 = vpop.permute.xlu0 %588
      %v591 = vlaneseq
      %v592 = vshrl.u32 %v591, 7
      %v593 = vsub.s32 0, %v592
      %v594 = vrot.slane %v568, %v593
      %v595 = vlaneseq
      %v596 = vshrl.u32 %v595, 7
      %v597 = vsub.s32 0, %v596
      %v598 = vrot.slane %v570, %v597
      %v599 = vadd.f32 %v574, %v594
      %v600 = vadd.f32 %v574, %v598
      %v601 = vadd.f32 %v579, %v594
      %v602 = vadd.f32 %v579, %v598
      %v603 = vadd.f32 %v584, %v594
      %v604 = vadd.f32 %v584, %v598
      %v605 = vadd.f32 %v589, %v594
      %v606 = vadd.f32 %v589, %v598
      %v607 = vmul.f32 %v252, %v599
      %v608 = vmul.f32 %v253, %v600
      %v609 = vmul.f32 %v254, %v601
      %v610 = vmul.f32 %v255, %v602
      %v611 = vmul.f32 %v256, %v603
      %v612 = vmul.f32 %v257, %v604
      %v613 = vmul.f32 %v258, %v605
      %v614 = vmul.f32 %v259, %v606
      %615 = vst [vmem:[%s251] sm:$0xff] %v607
      %616 = vst [vmem:[%s251 + $0x8] sm:$0xff] %v608
      %617 = vst [vmem:[%s251 + $0x10] sm:$0xff] %v609
      %618 = vst [vmem:[%s251 + $0x18] sm:$0xff] %v610
      %619 = vst [vmem:[%s251 + $0x20] sm:$0xff] %v611
      %620 = vst [vmem:[%s251 + $0x28] sm:$0xff] %v612
      %621 = vst [vmem:[%s251 + $0x30] sm:$0xff] %v613
      %622 = vst [vmem:[%s251 + $0x38] sm:$0xff] %v614
      %p623 = scmp.lt.s32.totalorder %s17, 1
      %s624 = scalar_select %p623, %s17, 1
      %s625 = smul.addr %s624, 8
      %s626 = smul.addr %s625, 8
      %s627 = scalar_lea.vmem %s6, %s626
      // Predicated region
      $region45: #{scse_block.1} parent=43 // pred_check
        %p628 = pneg %p166
      $region46: #{scse_block.1} parent=43 // pred_check_branch
        %630 = sbr.rel (%p628) target = $region48
      $region47: #{scse_block.1} parent=43 // pred_region
        _
      $region48: #{scse_block.1} parent=43 // pred_fallthru
        _
    $region44: #{scse_block.1} parent=5 // pred_fallthru
      _
    %p631 = scmp.le.s32.totalorder 2, %s12
    // Predicated region
    $region49: #{scse_block.1} parent=5 // pred_check
      %p632 = pneg %p631
    $region50: #{scse_block.1} parent=5 // pred_check_branch
      %634 = sbr.rel (%p632) target = $region52
    $region51: #{scse_block.1} parent=5 // pred_region
      %s635 = ssub.s32 %s12, 2
      // Predicated region
      $region53: #{scse_block.1} parent=51 // pred_check
        %p636 = pneg %p172
      $region54: #{scse_block.1} parent=51 // pred_check_branch
        %638 = sbr.rel (%p636) target = $region56
      $region55: #{scse_block.1} parent=51 // pred_region
        %p639 = scmp.lt.s32.totalorder %s18, 1
        %s640 = scalar_select %p639, %s18, 1
        %s641 = smul.addr %s640, 8
        %s642 = smul.addr %s641, 8
        %s643 = scalar_lea.vmem %s6, %s642
      $region56: #{scse_block.1} parent=51 // pred_fallthru
        _
    $region52: #{scse_block.1} parent=5 // pred_fallthru
      _
  $region6: #{scse_block.1} parent=0 // loop_footer
    %s16 = sadd.s32 1, %s12
  $region7: #{scse_block.1} parent=0 // loop_footer_branch
    %11 = sbr.rel target = $region3
  $region8: #{scse_block.1} parent=0 // loop_exit
    _

</llo_original>
